<compile_context>
chip_gen: v6e
topology: v6e:2x2x1
jax: 0.10.0
libtpu: 0.0.40
codegen_flags: <defaults>
</compile_context>

<pallas_src>
import math

import numpy as np
import jax
import jax.numpy as jnp
from jax.experimental import pallas as pl
from jax.experimental.pallas import tpu as pltpu

LANE = 128
# Conservative double-buffered VMEM budget: fits every generation's default
# scoped-VMEM limit (v5e 16 MiB / v6e 32 MiB / v7x 32 MiB).
VMEM_BUDGET_BYTES = 12 * 1024 * 1024
MAX_BATCH_BLOCK = 4


def _sublane_pack(dtype) -> int:
    # Sublane packing of the dtype: f32 -> 8 rows, bf16 -> 16, int8/fp8 -> 32.
    return max(8, 32 // np.dtype(dtype).itemsize)


def _pick_batch_block(B: int, cap: int = MAX_BATCH_BLOCK) -> int:
    # Largest divisor of B that is <= cap (avoids partial batch blocks).
    for b in range(min(B, cap), 0, -1):
        if B % b == 0:
            return b
    return 1


def _mask_mul_kernel(x_ref, m_ref, o_ref):
    # x_ref/o_ref: (B_blk, tile_rows, 128); m_ref: (tile_rows, 128).
    # DMA-bound: the in-kernel mask convert + multiply are free VPU work.
    m = m_ref[...].astype(x_ref.dtype)
    o_ref[...] = (x_ref[...] * m[None, :, :]).astype(o_ref.dtype)


def brain_post_process(x, brain_mask, *, tile_rows=None):
    """output = x * brain_mask.  x: (B, Z, H, W), brain_mask: (Z, H, W).

    The mask is applied in whatever dtype it is stored in (e.g. a cached int8
    copy of the module's 0/1 float32 parameter) and converted inside the
    kernel, avoiding a wrapper-side full-mask cast round trip.
    """
    B = x.shape[0]
    spatial = x.shape[1:]
    assert brain_mask.shape == spatial, (brain_mask.shape, spatial)
    S = math.prod(spatial)

    rows = pl.cdiv(S, LANE)
    s_lane = rows * LANE

    x2 = x.reshape(B, S)
    m2 = brain_mask.reshape(S)
    if s_lane != S:
        # Tiny pad to a lane multiple only (never to a tile multiple).
        x2 = jnp.pad(x2, ((0, 0), (0, s_lane - S)))
        m2 = jnp.pad(m2, (0, s_lane - S))
    x3 = x2.reshape(B, rows, LANE)
    m3 = m2.reshape(rows, LANE)

    b_blk = _pick_batch_block(B)

    # tile_rows from the double-buffered VMEM budget:
    #   2 * (x_block + out_block + mask_block) bytes per grid step.
    bytes_per_row = LANE * (2 * b_blk * x.dtype.itemsize
                            + brain_mask.dtype.itemsize)
    if tile_rows is None:
        tile_rows = max(8, VMEM_BUDGET_BYTES // (2 * bytes_per_row))
    align = max(_sublane_pack(x.dtype), _sublane_pack(brain_mask.dtype))
    if tile_rows >= rows:
        tile_rows = rows                      # block == full dim: always legal
    else:
        tile_rows = max(align, (tile_rows // align) * align)

    n_tiles = pl.cdiv(rows, tile_rows)        # boundary tile clipped by Pallas
    n_bblk = B // b_blk

    out = pl.pallas_call(
        _mask_mul_kernel,
        out_shape=jax.ShapeDtypeStruct((B, rows, LANE), x.dtype),
        grid_spec=pltpu.PrefetchScalarGridSpec(
            num_scalar_prefetch=0,
            # Spatial tiles outer, batch inner: the mask index_map ignores the
            # batch index, so each mask tile is DMA'd once per spatial tile
            # and stays resident across the batch sweep.
            grid=(n_tiles, n_bblk),
            in_specs=[
                pl.BlockSpec((b_blk, tile_rows, LANE),
                             lambda s, b: (b, s, 0)),
                pl.BlockSpec((tile_rows, LANE),
                             lambda s, b: (s, 0)),
            ],
            out_specs=pl.BlockSpec((b_blk, tile_rows, LANE),
                                   lambda s, b: (b, s, 0)),
        ),
        # Both axes independent (no accumulation): let v7x megacore shard
        # either one.  No effect on single-TC v5e/v6e.
        compiler_params=pltpu.CompilerParams(
            dimension_semantics=("parallel", "parallel")),
        # NOTE: if the caller donates x (dead after this op), add
        # input_output_aliases={0: 0} to reuse its HBM allocation for free.
    )(x3, m3)

    out = out.reshape(B, s_lane)
    if s_lane != S:
        out = out[:, :S]
    return out.reshape((B,) + spatial)


def make_brain_mask(key, z, h, w):
    """Deterministic synthetic 0/1 brain mask, cached as int8.

    TODO(synk): the real module loads './dataset/brainmask.nii' (float32) via
    nibabel; a synthetic binary volume stands in here.  Storing the 0/1 mask
    as int8 is numerically exact and cuts mask HBM/VMEM traffic 4x vs float32.
    """
    u = jax.random.uniform(key, (z, h, w))
    return (u > 0.3).astype(jnp.int8)


if __name__ == "__main__":
    B, Z, H, W = 2, 8, 16, 16
    key = jax.random.PRNGKey(0)
    k_mask, k_x = jax.random.split(key)

    brain_mask = make_brain_mask(k_mask, Z, H, W)        # (Z, H, W) int8 {0,1}
    x = jax.random.normal(k_x, (B, Z, H, W), dtype=jnp.float32)

    out = brain_post_process(x, brain_mask)
    out = jax.block_until_ready(out)

    ref = x * brain_mask.astype(jnp.float32)[None]
    assert out.shape == (B, Z, H, W)
    assert out.dtype == x.dtype
    assert jnp.allclose(out, ref), "mismatch vs reference"

    print("KERNEL_OK")
</pallas_src>

<mosaic_0001>
module attributes {stable_mosaic.version = 11 : i64} {
  func.func @_mask_mul_kernel(%arg0: i32, %arg1: i32, %arg2: memref<2x16x128xf32, #tpu.memory_space<vmem>>, %arg3: memref<16x128xi8, #tpu.memory_space<vmem>>, %arg4: memref<2x16x128xf32, #tpu.memory_space<vmem>>) attributes {dimension_semantics = [#tpu.dimension_semantics<parallel>, #tpu.dimension_semantics<parallel>], iteration_bounds = array<i64: 1, 1>, scalar_prefetch = 0 : i64, scratch_operands = 0 : i64, tpu.core_type = #tpu.core_type<tc>, window_params = [{transform_indices = @transform_0, window_bounds = array<i64: 2, 16, 128>}, {transform_indices = @transform_1, window_bounds = array<i64: 16, 128>}, {transform_indices = @transform_2, window_bounds = array<i64: 2, 16, 128>}]} {
    %c0 = arith.constant 0 : index
    %c0_0 = arith.constant 0 : index
    %0 = vector.load %arg3[%c0, %c0_0] : memref<16x128xi8, #tpu.memory_space<vmem>>, vector<16x128xi8>
    %1 = arith.sitofp %0 : vector<16x128xi8> to vector<16x128xf32>
    %c0_1 = arith.constant 0 : index
    %c0_2 = arith.constant 0 : index
    %c0_3 = arith.constant 0 : index
    %2 = vector.load %arg2[%c0_1, %c0_2, %c0_3] : memref<2x16x128xf32, #tpu.memory_space<vmem>>, vector<2x16x128xf32>
    %3 = vector.shape_cast %1 : vector<16x128xf32> to vector<1x16x128xf32>
    %4 = vector.broadcast %3 : vector<1x16x128xf32> to vector<2x16x128xf32>
    %5 = arith.mulf %2, %4 : vector<2x16x128xf32>
    %c0_4 = arith.constant 0 : index
    %c0_5 = arith.constant 0 : index
    %c0_6 = arith.constant 0 : index
    %6 = vector.load %arg4[%c0_4, %c0_5, %c0_6] : memref<2x16x128xf32, #tpu.memory_space<vmem>>, vector<2x16x128xf32>
    tpu.vector_store %arg4[%c0_4, %c0_5, %c0_6], %5 {strides = array<i32>} : memref<2x16x128xf32, #tpu.memory_space<vmem>>, vector<2x16x128xf32>,
    return
  }
  func.func @transform_0(%arg0: i32, %arg1: i32) -> (i32, i32, i32) {
    %c0_i32 = arith.constant 0 : i32
    %c0_i32_0 = arith.constant 0 : i32
    return %arg1, %arg0, %c0_i32 : i32, i32, i32
  }
  func.func @transform_1(%arg0: i32, %arg1: i32) -> (i32, i32) {
    %c0_i32 = arith.constant 0 : i32
    %c0_i32_0 = arith.constant 0 : i32
    return %arg0, %c0_i32 : i32, i32
  }
  func.func @transform_2(%arg0: i32, %arg1: i32) -> (i32, i32, i32) {
    %c0_i32 = arith.constant 0 : i32
    %c0_i32_0 = arith.constant 0 : i32
    return %arg1, %arg0, %c0_i32 : i32, i32, i32
  }
}

</mosaic_0001>

<llo_original>
// kernel: tpu_custom_call.1
$region0: #{tpu_custom_call.1}
  #allocation0 [shape = 'u32[]', space=smem, size = 0x4, offset = 0x4, fixed_abs, tag = 'smem constant byte address 0x4 - core index']
  #allocation1 [shape = 'u32[144,128]{1,0:T(1,128)}', space=vmem, size = 0x12000, scoped, tag = 'internal scratch']
  %s0 = inlined_call_operand.hbm [shape: f32[2,16,128], index: 0, kind: input, shape index: {}]
  %s1 = inlined_call_operand.hbm [shape: s8[16,128], index: 1, kind: input, shape index: {}]
  %s2 = inlined_call_operand.hbm [shape: f32[2,16,128], index: 2, kind: output, shape index: {}]
  %s3 = sld [smem:[#allocation0]]
  $region26: #{tpu_custom_call.1} parent=0
    _
  %s5 = ssub.s32 1, %s3
  %s6 = scalar_select 0, %s5, %s3
  $region1: #{tpu_custom_call.1} parent=0
    #allocation2 [shape = 'u8[16384]{0}', space=vmem, size = 0x4000, scoped, tag = 'input window, operand 0, single buffered']
    #allocation3 [shape = 's32[1]{0}', space=sflag, size = 0x4, scoped, tag = 'scoped memory for tpu_custom_call.1']
    #allocation4 [shape = 's32[1]{0}', space=sflag, size = 0x4, scoped, tag = 'scoped memory for tpu_custom_call.1']
    #allocation5 [shape = 'u8[2048]{0}', space=vmem, size = 0x800, scoped, tag = 'input window, operand 1, single buffered']
    #allocation6 [shape = 's32[1]{0}', space=sflag, size = 0x4, scoped, tag = 'scoped memory for tpu_custom_call.1']
    #allocation7 [shape = 'u8[16384]{0}', space=vmem, size = 0x4000, scoped, tag = 'output window, operand 0, single buffered']
    %7 = vsyncpa [#allocation3], 0
    %8 = vsyncpa [#allocation6], 0
    %9 = vsyncpa [#allocation4], 0
    // Predicated region
    $region2: #{tpu_custom_call.1} parent=1 // pred_check
      _
    $region3: #{tpu_custom_call.1} parent=1 // pred_check_branch
      %11 = sbr.rel (0) target = $region5
    $region4: #{tpu_custom_call.1} parent=1 // pred_region
      %s13 = ssub.s32 512, 512
      %14 = vsyncadd [#allocation3], %s13
      %s15 = sshll.u32 [#allocation2], 4
      %s16 = int_to_ptr.vmem [resolvable:$true] %s15
      %21 = dma.hbm_to_vmem [thread:$0]  %s0, 512, %s16, [#allocation3], 128, 128, 8
    $region5: #{tpu_custom_call.1} parent=1 // pred_fallthru
      _
    // Predicated region
    $region6: #{tpu_custom_call.1} parent=1 // pred_check
      _
    $region7: #{tpu_custom_call.1} parent=1 // pred_check_branch
      %23 = sbr.rel (0) target = $region9
    $region8: #{tpu_custom_call.1} parent=1 // pred_region
      %s25 = ssub.s32 64, 64
      %26 = vsyncadd [#allocation6], %s25
      %s27 = sshll.u32 [#allocation5], 4
      %s28 = int_to_ptr.vmem [resolvable:$true] %s27
      %33 = dma.hbm_to_vmem [thread:$0]  %s1, 64, %s28, [#allocation6], 32, 32, 2
    $region9: #{tpu_custom_call.1} parent=1 // pred_fallthru
      _
    // Predicated region
    $region10: #{tpu_custom_call.1} parent=1 // pred_check
      _
    $region11: #{tpu_custom_call.1} parent=1 // pred_check_branch
      %35 = sbr.rel (0) target = $region13
    $region12: #{tpu_custom_call.1} parent=1 // pred_region
      %36 = dma.done [#allocation3], 512
    $region13: #{tpu_custom_call.1} parent=1 // pred_fallthru
      _
    // Predicated region
    $region14: #{tpu_custom_call.1} parent=1 // pred_check
      _
    $region15: #{tpu_custom_call.1} parent=1 // pred_check_branch
      %38 = sbr.rel (0) target = $region17
    $region16: #{tpu_custom_call.1} parent=1 // pred_region
      %39 = dma.done [#allocation6], 64
    $region17: #{tpu_custom_call.1} parent=1 // pred_fallthru
      _
    %v40 = vld [vmem:[#allocation5] sm:$0x3]
    %v41 = vld [vmem:[#allocation5 + $0x2] sm:$0x3]
    %v42 = vunpack.c.0.s8 %v40
    %v43 = vunpack.c.0.s8 %v41
    %v44 = vcvt.s32.f32 %v42
    %v45 = vcvt.s32.f32 %v43
    %v46 = vld [vmem:[#allocation2] sm:$0xff]
    %v47 = vld [vmem:[#allocation2 + $0x8] sm:$0xff]
    %v48 = vld [vmem:[#allocation2 + $0x10] sm:$0xff]
    %v49 = vld [vmem:[#allocation2 + $0x18] sm:$0xff]
    %v50 = vmul.f32 %v46, %v44
    %v51 = vmul.f32 %v47, %v45
    %v52 = vmul.f32 %v48, %v44
    %v53 = vmul.f32 %v49, %v45
    %54 = vst [vmem:[#allocation7] sm:$0xff] %v50
    %55 = vst [vmem:[#allocation7 + $0x8] sm:$0xff] %v51
    %56 = vst [vmem:[#allocation7 + $0x10] sm:$0xff] %v52
    %57 = vst [vmem:[#allocation7 + $0x18] sm:$0xff] %v53
    // Predicated region
    $region18: #{tpu_custom_call.1} parent=1 // pred_check
      _
    $region19: #{tpu_custom_call.1} parent=1 // pred_check_branch
      %59 = sbr.rel (0) target = $region21
    $region20: #{tpu_custom_call.1} parent=1 // pred_region
      %s61 = ssub.s32 512, 512
      %62 = vsyncadd [#allocation4], %s61
      %s63 = sshll.u32 [#allocation7], 4
      %s64 = int_to_ptr.vmem [resolvable:$true] %s63
      %69 = dma.vmem_to_hbm [thread:$0]  %s64, 512, %s2, [#allocation4], 128, 128, 8
    $region21: #{tpu_custom_call.1} parent=1 // pred_fallthru
      _
    // Predicated region
    $region22: #{tpu_custom_call.1} parent=1 // pred_check
      _
    $region23: #{tpu_custom_call.1} parent=1 // pred_check_branch
      %71 = sbr.rel (0) target = $region25
    $region24: #{tpu_custom_call.1} parent=1 // pred_region
      %72 = dma.done [#allocation4], 512
    $region25: #{tpu_custom_call.1} parent=1 // pred_fallthru
      _
    %73 = vsyncpa [#allocation3], 1
    %74 = vsyncpa [#allocation6], 1
    %75 = vsyncpa [#allocation4], 1

</llo_original>
